<compile_context>
chip_gen: v7x
topology: tpu7x:2x2x1
jax: 0.10.0
libtpu: 0.0.40
codegen_flags: <defaults>
</compile_context>

<pallas_src>
import functools

import numpy as np
import jax
import jax.numpy as jnp
from jax.experimental import pallas as pl
from jax.experimental.pallas import tpu as pltpu


_VMEM = pl.BlockSpec(memory_space=pltpu.MemorySpace.VMEM)
_SMEM = pl.BlockSpec(memory_space=pltpu.MemorySpace.SMEM)
_VMEM_LIMIT = 64 * 1024 * 1024     # safe on v7x (64 MiB physical VMEM)


def _round_up(x, m):
    return ((x + m - 1) // m) * m


# ----------------------------------------------------------------------------
# Kernel 1: fused L2-normalize + prototype matmul for BOTH embedding branches.
#   out_nodrop = W_n @ normalize(nodrop_emb).T      (K, N)  cluster-major
#   out_drop   = W_n @ maybe_normalize(drop_emb).T  (K, N)
# Row-tiled grid over N, W normalized in-kernel (tiny, stays resident),
# lane-dense (K, TM) output stores.  Padded node rows are zero -> zero logits.
# ----------------------------------------------------------------------------
def _proto_matmul_kernel(nodrop_ref, drop_ref, w_ref,
                         nodrop_out_ref, drop_out_ref, *, normalize_dropout):
    w = w_ref[...].astype(jnp.float32)                               # (K, D)
    w = w * jax.lax.rsqrt(jnp.maximum(
        jnp.sum(w * w, axis=-1, keepdims=True), 1e-24))

    def l2n(x):
        return x * jax.lax.rsqrt(jnp.maximum(
            jnp.sum(x * x, axis=-1, keepdims=True), 1e-24))

    xn = l2n(nodrop_ref[...].astype(jnp.float32))                    # (TM, D)
    xd = drop_ref[...].astype(jnp.float32)
    if normalize_dropout:
        xd = l2n(xd)

    dims = (((1,), (1,)), ((), ()))                                  # contract D
    nodrop_out_ref[...] = jax.lax.dot_general(
        w, xn, dims, preferred_element_type=jnp.float32)             # (K, TM)
    drop_out_ref[...] = jax.lax.dot_general(
        w, xd, dims, preferred_element_type=jnp.float32)


def prototype_logits(nodrop_emb, dropout_emb, w_proto, *,
                     normalize_dropout, tile_n=1024):
    """Returns PADDED cluster-major logits (K, N_pad) for both branches."""
    n, d = nodrop_emb.shape
    k = w_proto.shape[0]
    tm = min(tile_n, _round_up(n, 128))
    n_pad = _round_up(n, tm)
    if n_pad != n:
        pad = ((0, n_pad - n), (0, 0))
        nodrop_emb = jnp.pad(nodrop_emb, pad)
        dropout_emb = jnp.pad(dropout_emb, pad)

    row_spec = pl.BlockSpec((tm, d), lambda i: (i, 0))
    w_spec = pl.BlockSpec((k, d), lambda i: (0, 0))
    out_spec = pl.BlockSpec((k, tm), lambda i: (0, i))

    outs = pl.pallas_call(
        functools.partial(_proto_matmul_kernel,
                          normalize_dropout=normalize_dropout),
        grid=(n_pad // tm,),
        out_shape=(jax.ShapeDtypeStruct((k, n_pad), jnp.float32),
                   jax.ShapeDtypeStruct((k, n_pad), jnp.float32)),
        in_specs=[row_spec, row_spec, w_spec],
        out_specs=[out_spec, out_spec],
        compiler_params=pltpu.CompilerParams(
            dimension_semantics=("parallel",),
            vmem_limit_bytes=_VMEM_LIMIT),
        cost_estimate=pl.CostEstimate(
            flops=4 * n_pad * d * k,
            transcendentals=2 * n_pad + k,
            bytes_accessed=(2 * n_pad * d + k * d + 2 * k * n_pad) * 4),
    )(nodrop_emb, dropout_emb, w_proto)
    return outs[0], outs[1], n_pad


# ----------------------------------------------------------------------------
# Kernel 2: fused sinkhorn-knopp + first-occurrence argmax + self-label CE.
# Input is the padded cluster-major (K, N_pad) dropout-branch logits; padded
# columns (>= n_valid) are masked out of every sum, the argmax labels and the
# final CE mean.  Per-cluster "row" sums are lane reductions, per-sample
# "col" sums are cheap elementwise adds across K planes.  Only the scalar
# loss leaves the chip.
# TODO(synk): for graphs where K*N*4 exceeds VMEM (v7x: 64 MiB) this needs a
# multi-pass / bf16-resident sinkhorn; single-block is correct & fast below that.
# ----------------------------------------------------------------------------
def _sinkhorn_ce_kernel(logits_ref, loss_ref, *, epsilon, n_iters, n_valid):
    logits = logits_ref[...].astype(jnp.float32)                     # (K, Np)
    k, n_pad = logits.shape
    cidx = jax.lax.broadcasted_iota(jnp.int32, (k, n_pad), 1)
    valid = cidx < n_valid                                           # (K, Np)

    # global-max shift is a pure global scale on Q -> cancels at first sum-norm
    gmax = jnp.max(jnp.where(valid, logits, -jnp.inf))
    shifted = jnp.where(valid, (logits - gmax) / epsilon, -1e30)
    q = jnp.exp(shifted)                                             # swav Q, padded cols == 0
    q = q / jnp.sum(q)
    for _ in range(n_iters):
        row = jnp.sum(q, axis=1, keepdims=True)                      # (K, 1) per-cluster
        row = jnp.maximum(row, 1e-30)
        q = q * pl.reciprocal(row * k, approx=False)                 # /= row ; /= K
        col = jnp.sum(q, axis=0, keepdims=True)                      # (1, Np) per-sample
        col = jnp.where(col > 0.0, col, 1.0)                         # padded cols sum to 0
        q = q * pl.reciprocal(col * n_valid, approx=True)            # /= col ; /= B
    q = q * n_valid

    # first-occurrence argmax over clusters == torch.max(Q.t(), dim=-1)[1]
    ridx = jax.lax.broadcasted_iota(jnp.int32, (k, n_pad), 0)
    qmax = jnp.max(q, axis=0, keepdims=True)
    label = jnp.min(jnp.where(q == qmax, ridx, k), axis=0, keepdims=True)

    # cross entropy of the raw logits against the sinkhorn labels, mean over N
    m = jnp.max(logits, axis=0, keepdims=True)
    lse = jnp.log(jnp.sum(jnp.exp(logits - m), axis=0, keepdims=True)) + m
    logp = logits - lse
    picked = jnp.sum(jnp.where((ridx == label) & valid, logp, 0.0), axis=0)
    loss_ref[0, 0] = -jnp.sum(picked) / n_valid


def sinkhorn_self_label_loss(cluster_kn_pad, epsilon, n_iters, n_valid):
    out = pl.pallas_call(
        functools.partial(_sinkhorn_ce_kernel,
                          epsilon=epsilon, n_iters=n_iters, n_valid=n_valid),
        out_shape=jax.ShapeDtypeStruct((1, 1), jnp.float32),
        in_specs=[_VMEM],
        out_specs=_SMEM,
        compiler_params=pltpu.CompilerParams(vmem_limit_bytes=_VMEM_LIMIT),
    )(cluster_kn_pad)
    return out[0, 0]


# ----------------------------------------------------------------------------
# Kernel 3: fused softmax + Jensen-Shannon divergence over edge tiles.
# Inputs are gathered endpoint logits in cluster-major (K, E/128, 128) layout
# (edges on the lane axis); output is a lane-dense (tile_rows, 128) block.
# log-probs are computed as (x - max) - log(sum) -> no log(softmax) round trip.
# ----------------------------------------------------------------------------
def _softmax_js_kernel(lu_ref, lv_ref, o_ref):
    k = lu_ref.shape[0]
    lu = [lu_ref[i].astype(jnp.float32) for i in range(k)]           # each (TB, 128)
    lv = [lv_ref[i].astype(jnp.float32) for i in range(k)]

    def softmax_and_logp(xs):
        m = xs[0]
        for x in xs[1:]:
            m = jnp.maximum(m, x)
        es = [jnp.exp(x - m) for x in xs]
        s = es[0]
        for e in es[1:]:
            s = s + e
        inv = pl.reciprocal(s, approx=True)
        log_s = jnp.log(s)
        ps = [e * inv for e in es]
        logps = [(x - m) - log_s for x in xs]
        return ps, logps

    pu, log_pu = softmax_and_logp(lu)
    pv, log_pv = softmax_and_logp(lv)

    acc = jnp.zeros_like(pu[0])
    for i in range(k):
        med = 0.5 * (pu[i] + pv[i])
        log_m = jnp.log(jnp.maximum(med, 1e-38))
        # F.kl_div(log_m, p) with xlogy(0, .) == 0 semantics
        acc = acc + jnp.where(pu[i] > 0.0, pu[i] * (log_pu[i] - log_m), 0.0)
        acc = acc + jnp.where(pv[i] > 0.0, pv[i] * (log_pv[i] - log_m), 0.0)
    o_ref[...] = 0.5 * jnp.maximum(acc, 0.0)


def edge_js_divergence(logits_kn_pad, u, v, *, max_tile_rows=64):
    """logits_kn_pad: (K, N_pad) cluster-major no-drop logits; u, v: (E,)."""
    k = logits_kn_pad.shape[0]
    e = int(u.shape[0])
    lanes = 128
    # adaptive tile: shrink (in multiples of 8 sublanes) for tiny edge sets
    rows_needed = pl.cdiv(max(e, 1), lanes)
    tile_rows = min(max_tile_rows, _round_up(rows_needed, 8))
    tile_e = tile_rows * lanes
    e_pad = _round_up(max(e, 1), tile_e)
    u_p = jnp.pad(u, (0, e_pad - e))          # pad with node 0 -> valid rows
    v_p = jnp.pad(v, (0, e_pad - e))
    lu = jnp.take(logits_kn_pad, u_p, axis=1).reshape(k, e_pad // lanes, lanes)
    lv = jnp.take(logits_kn_pad, v_p, axis=1).reshape(k, e_pad // lanes, lanes)

    in_spec = pl.BlockSpec((k, tile_rows, lanes), lambda i: (0, i, 0))
    out = pl.pallas_call(
        _softmax_js_kernel,
        grid=(e_pad // tile_e,),
        out_shape=jax.ShapeDtypeStruct((e_pad // lanes, lanes), jnp.float32),
        in_specs=[in_spec, in_spec],
        out_specs=pl.BlockSpec((tile_rows, lanes), lambda i: (i, 0)),
        compiler_params=pltpu.CompilerParams(
            dimension_semantics=("parallel",),
            vmem_limit_bytes=_VMEM_LIMIT),
        cost_estimate=pl.CostEstimate(
            flops=16 * e_pad * k,
            transcendentals=3 * e_pad * k + 4 * e_pad,
            bytes_accessed=(2 * e_pad * k + e_pad) * 4),
    )(lu, lv)
    return out.reshape(-1)[:e]


# ----------------------------------------------------------------------------
# Graph glue (static numpy): symmetric ring graph + reverse-edge id table.
# ----------------------------------------------------------------------------
def make_ring_graph(num_nodes):
    src, dst = [], []
    for i in range(num_nodes):
        src.append(i); dst.append((i + 1) % num_nodes)
    for i in range(num_nodes):
        src.append((i + 1) % num_nodes); dst.append(i)
    u = np.asarray(src, np.int32)
    v = np.asarray(dst, np.int32)
    eid = {(int(a), int(b)): i for i, (a, b) in enumerate(zip(u, v))}
    dst2src = np.asarray([eid[(int(b), int(a))] for a, b in zip(u, v)], np.int32)
    eidx = np.arange(len(u))
    single_mask = (eidx == np.minimum(eidx, dst2src)) & (u != v)
    single_edge_ids = eidx[single_mask].astype(np.int32)
    return u, v, dst2src, single_edge_ids


# ----------------------------------------------------------------------------
# ClusterDropV2._drop forward (training path, drop_rate > 0).
# ----------------------------------------------------------------------------
def cluster_drop_v2_forward(w_proto, graph, dropout_emb, nodrop_emb, label,
                            train_mask, *, drop_rate, epsilon,
                            sinkhorn_iterations, key, normalize=True):
    u, v, dst2src, single_edge_ids, num_nodes = graph
    num_edges = u.shape[0]
    n = nodrop_emb.shape[0]

    # fused: normalize(W) once, normalize(nodrop_emb), maybe-normalize(drop_emb),
    # two MXU matmuls -> padded cluster-major (K, N_pad) logits for both branches.
    nodrop_kn, cluster_kn, _ = prototype_logits(
        nodrop_emb, dropout_emb, w_proto, normalize_dropout=normalize)

    # fused sinkhorn-knopp + argmax + cross-entropy (assignment never hits HBM);
    # padded columns are masked in-kernel, no HBM slice needed.
    self_label_loss = sinkhorn_self_label_loss(
        cluster_kn, epsilon, sinkhorn_iterations, n_valid=n)

    # TODO(synk): ClusterAssignmentLoss uses data-dependent boolean indexing
    # (per-predicted-cluster dynamic shapes / vstack) with no clean static-shape
    # Pallas equivalent; returned as 0 here.
    cluster_assignment_loss = jnp.float32(0.0)

    # guided scores = per-edge JS divergence of softmaxed no-drop assignments,
    # computed only on the single-direction edges actually sampled from.
    u_s = u[single_edge_ids]
    v_s = v[single_edge_ids]
    sample_prob = edge_js_divergence(nodrop_kn, u_s, v_s)

    total = jnp.sum(sample_prob)
    n_single = int(single_edge_ids.shape[0])
    sample_prob = jnp.where(
        total > 0, sample_prob / total,
        jnp.full_like(sample_prob, 1.0 / n_single))   # all-zero-score guard
    remove_size = int(n_single * drop_rate)

    # torch.multinomial(sample_prob, remove_size, replacement=False)
    # -> Gumbel top-k (plain JAX glue; not a TPU hot path)
    gumbel = jax.random.gumbel(key, sample_prob.shape, jnp.float32)
    remove_pos = jax.lax.top_k(jnp.log(sample_prob) + gumbel, remove_size)[1]
    remove_eids = single_edge_ids[remove_pos]

    edge_weight = jnp.ones((num_edges,), jnp.float32).at[remove_eids].set(0.0)
    edge_weight = edge_weight * edge_weight[dst2src]   # drop both directions
    keep_mask = edge_weight > 0

    # DGL EdgeWeightNorm(norm='both') with unit weights on remaining edges:
    # w_e = 1/sqrt(deg(u)*deg(v)); in-degree only is correct here because the
    # graph is symmetric (both edge directions present).
    w_kept = keep_mask.astype(jnp.float32)
    deg = jnp.zeros((num_nodes,), jnp.float32).at[v].add(w_kept)
    inv_sqrt = jnp.where(deg > 0, jax.lax.rsqrt(jnp.maximum(deg, 1e-12)), 0.0)
    weight = w_kept * inv_sqrt[u] * inv_sqrt[v]

    return keep_mask, weight, self_label_loss, cluster_assignment_loss


if __name__ == "__main__":
    N, D, K = 16, 32, 8            # nodes, prototype_dim (== emb dim), n_clusters
    DROP_RATE = 0.3
    EPSILON = 0.05
    SINKHORN_ITERS = 3

    u_np, v_np, dst2src_np, single_ids_np = make_ring_graph(N)
    graph = (jnp.asarray(u_np), jnp.asarray(v_np), jnp.asarray(dst2src_np),
             jnp.asarray(single_ids_np), N)

    key = jax.random.PRNGKey(0)
    k_emb, k_nodrop, k_w, k_lab, k_mask, k_samp = jax.random.split(key, 6)

    dropout_emb = jax.random.normal(k_emb, (N, D), jnp.float32)
    nodrop_emb = jax.random.normal(k_nodrop, (N, D), jnp.float32)
    # c_prototype: nn.Linear(prototype_dim, n_clusters, bias=False) -> (K, D)
    w_proto = 0.1 * jax.random.normal(k_w, (K, D), jnp.float32)
    label = jax.random.randint(k_lab, (N,), 0, 4, jnp.int32)
    train_mask = jax.random.bernoulli(k_mask, 0.5, (N,))

    outs = cluster_drop_v2_forward(
        w_proto, graph, dropout_emb, nodrop_emb, label, train_mask,
        drop_rate=DROP_RATE, epsilon=EPSILON,
        sinkhorn_iterations=SINKHORN_ITERS, key=k_samp, normalize=True)

    jax.block_until_ready(outs)
    print("KERNEL_OK")
</pallas_src>

<mosaic_0001>
module attributes {stable_mosaic.version = 11 : i64} {
  func.func @_proto_matmul_kernel(%arg0: i32, %arg1: memref<128x32xf32, #tpu.memory_space<vmem>>, %arg2: memref<128x32xf32, #tpu.memory_space<vmem>>, %arg3: memref<8x32xf32, #tpu.memory_space<vmem>>, %arg4: memref<8x128xf32, #tpu.memory_space<vmem>>, %arg5: memref<8x128xf32, #tpu.memory_space<vmem>>) attributes {dimension_semantics = [#tpu.dimension_semantics<parallel>], iteration_bounds = array<i64: 1>, scalar_prefetch = 0 : i64, scratch_operands = 0 : i64, tpu.core_type = #tpu.core_type<tc>, window_params = [{transform_indices = @transform_0, window_bounds = array<i64: 128, 32>}, {transform_indices = @transform_1, window_bounds = array<i64: 128, 32>}, {pipeline_mode = #tpu.pipeline_mode<synchronous>, transform_indices = @transform_2, window_bounds = array<i64: 8, 32>}, {transform_indices = @transform_3, window_bounds = array<i64: 8, 128>}, {transform_indices = @transform_4, window_bounds = array<i64: 8, 128>}]} {
    %c0 = arith.constant 0 : index
    %c0_0 = arith.constant 0 : index
    %0 = vector.load %arg3[%c0, %c0_0] : memref<8x32xf32, #tpu.memory_space<vmem>>, vector<8x32xf32>
    %1 = arith.mulf %0, %0 : vector<8x32xf32>
    %cst = arith.constant dense<0.000000e+00> : vector<8xf32>
    %2 = vector.multi_reduction <add>, %1, %cst [1] : vector<8x32xf32> to vector<8xf32>
    %3 = vector.shape_cast %2 : vector<8xf32> to vector<8x1xf32>
    %cst_1 = arith.constant 1.000000e-24 : f32
    %4 = vector.broadcast %cst_1 : f32 to vector<8x1xf32>
    %5 = arith.maximumf %3, %4 : vector<8x1xf32>
    %6 = math.rsqrt %5 : vector<8x1xf32>
    %7 = vector.broadcast %6 : vector<8x1xf32> to vector<8x32xf32>
    %8 = arith.mulf %0, %7 : vector<8x32xf32>
    %c0_2 = arith.constant 0 : index
    %c0_3 = arith.constant 0 : index
    %9 = vector.load %arg1[%c0_2, %c0_3] : memref<128x32xf32, #tpu.memory_space<vmem>>, vector<128x32xf32>
    %10 = arith.mulf %9, %9 : vector<128x32xf32>
    %cst_4 = arith.constant dense<0.000000e+00> : vector<128xf32>
    %11 = vector.multi_reduction <add>, %10, %cst_4 [1] : vector<128x32xf32> to vector<128xf32>
    %12 = vector.shape_cast %11 : vector<128xf32> to vector<128x1xf32>
    %cst_5 = arith.constant 1.000000e-24 : f32
    %13 = vector.broadcast %cst_5 : f32 to vector<128x1xf32>
    %14 = arith.maximumf %12, %13 : vector<128x1xf32>
    %15 = math.rsqrt %14 : vector<128x1xf32>
    %16 = vector.broadcast %15 : vector<128x1xf32> to vector<128x32xf32>
    %17 = arith.mulf %9, %16 : vector<128x32xf32>
    %c0_6 = arith.constant 0 : index
    %c0_7 = arith.constant 0 : index
    %18 = vector.load %arg2[%c0_6, %c0_7] : memref<128x32xf32, #tpu.memory_space<vmem>>, vector<128x32xf32>
    %19 = arith.mulf %18, %18 : vector<128x32xf32>
    %cst_8 = arith.constant dense<0.000000e+00> : vector<128xf32>
    %20 = vector.multi_reduction <add>, %19, %cst_8 [1] : vector<128x32xf32> to vector<128xf32>
    %21 = vector.shape_cast %20 : vector<128xf32> to vector<128x1xf32>
    %cst_9 = arith.constant 1.000000e-24 : f32
    %22 = vector.broadcast %cst_9 : f32 to vector<128x1xf32>
    %23 = arith.maximumf %21, %22 : vector<128x1xf32>
    %24 = math.rsqrt %23 : vector<128x1xf32>
    %25 = vector.broadcast %24 : vector<128x1xf32> to vector<128x32xf32>
    %26 = arith.mulf %18, %25 : vector<128x32xf32>
    %cst_10 = arith.constant dense<0.000000e+00> : vector<8x128xf32>
    %27 = tpu.matmul %8, %17, %cst_10 {dimension_numbers = #tpu.dot_dimension_numbers<[1], [1], [0], [0], [0, 0, 1, 0], [], []>} : vector<8x32xf32>, vector<128x32xf32>, vector<8x128xf32> -> vector<8x128xf32>
    %c0_11 = arith.constant 0 : index
    %c0_12 = arith.constant 0 : index
    %28 = vector.load %arg4[%c0_11, %c0_12] : memref<8x128xf32, #tpu.memory_space<vmem>>, vector<8x128xf32>
    tpu.vector_store %arg4[%c0_11, %c0_12], %27 {strides = array<i32>} : memref<8x128xf32, #tpu.memory_space<vmem>>, vector<8x128xf32>,
    %cst_13 = arith.constant dense<0.000000e+00> : vector<8x128xf32>
    %29 = tpu.matmul %8, %26, %cst_13 {dimension_numbers = #tpu.dot_dimension_numbers<[1], [1], [0], [0], [0, 0, 1, 0], [], []>} : vector<8x32xf32>, vector<128x32xf32>, vector<8x128xf32> -> vector<8x128xf32>
    %c0_14 = arith.constant 0 : index
    %c0_15 = arith.constant 0 : index
    %30 = vector.load %arg5[%c0_14, %c0_15] : memref<8x128xf32, #tpu.memory_space<vmem>>, vector<8x128xf32>
    tpu.vector_store %arg5[%c0_14, %c0_15], %29 {strides = array<i32>} : memref<8x128xf32, #tpu.memory_space<vmem>>, vector<8x128xf32>,
    return
  }
  func.func @transform_0(%arg0: i32) -> (i32, i32) {
    %c0_i32 = arith.constant 0 : i32
    %c0_i32_0 = arith.constant 0 : i32
    return %arg0, %c0_i32 : i32, i32
  }
  func.func @transform_1(%arg0: i32) -> (i32, i32) {
    %c0_i32 = arith.constant 0 : i32
    %c0_i32_0 = arith.constant 0 : i32
    return %arg0, %c0_i32 : i32, i32
  }
  func.func @transform_2(%arg0: i32) -> (i32, i32) {
    %c0_i32 = arith.constant 0 : i32
    %c0_i32_0 = arith.constant 0 : i32
    %c0_i32_1 = arith.constant 0 : i32
    return %c0_i32, %c0_i32_0 : i32, i32
  }
  func.func @transform_3(%arg0: i32) -> (i32, i32) {
    %c0_i32 = arith.constant 0 : i32
    %c0_i32_0 = arith.constant 0 : i32
    return %c0_i32, %arg0 : i32, i32
  }
  func.func @transform_4(%arg0: i32) -> (i32, i32) {
    %c0_i32 = arith.constant 0 : i32
    %c0_i32_0 = arith.constant 0 : i32
    return %c0_i32, %arg0 : i32, i32
  }
}

</mosaic_0001>

<llo_original>
// kernel: tpu_custom_call.1
$region0: #{tpu_custom_call.1}
  #allocation0 [shape = 'u32[]', space=smem, size = 0x4, offset = 0x4, fixed_abs, tag = 'smem constant byte address 0x4 - core index']
  #allocation1 [shape = 'u32[144,128]{1,0:T(1,128)}', space=vmem, size = 0x12000, scoped, tag = 'internal scratch']
  %s0 = inlined_call_operand.hbm [shape: f32[128,32], index: 0, kind: input, shape index: {}]
  %s1 = inlined_call_operand.hbm [shape: f32[128,32], index: 1, kind: input, shape index: {}]
  %s2 = inlined_call_operand.hbm [shape: f32[8,32], index: 2, kind: input, shape index: {}]
  %s3 = inlined_call_operand.hbm [shape: f32[8,128], index: 3, kind: output, shape index: {0}]
  %s4 = inlined_call_operand.hbm [shape: f32[8,128], index: 4, kind: output, shape index: {1}]
  %5 = xla_tuple %s3, %s4
  %s6 = sld [smem:[#allocation0]]
  $region42: #{tpu_custom_call.1} parent=0
    _
  %s8 = ssub.s32 1, %s6
  %s9 = scalar_select 0, %s8, %s6
  $region1: #{tpu_custom_call.1} parent=0
    #allocation2 [shape = 'u8[65536]{0}', space=vmem, size = 0x10000, scoped, tag = 'input window, operand 0, single buffered']
    #allocation3 [shape = 's32[1]{0}', space=sflag, size = 0x4, scoped, tag = 'scoped memory for tpu_custom_call.1']
    #allocation4 [shape = 's32[1]{0}', space=sflag, size = 0x4, scoped, tag = 'scoped memory for tpu_custom_call.1']
    #allocation5 [shape = 'u8[65536]{0}', space=vmem, size = 0x10000, scoped, tag = 'input window, operand 1, single buffered']
    #allocation6 [shape = 's32[1]{0}', space=sflag, size = 0x4, scoped, tag = 'scoped memory for tpu_custom_call.1']
    #allocation7 [shape = 'u8[4096]{0}', space=vmem, size = 0x1000, scoped, tag = 'input window, operand 2, single buffered']
    #allocation8 [shape = 'u8[4096]{0}', space=vmem, size = 0x1000, scoped, tag = 'output window, operand 0, single buffered']
    #allocation9 [shape = 'u8[4096]{0}', space=vmem, size = 0x1000, scoped, tag = 'output window, operand 1, single buffered']
    #allocation10 [shape = 's32[1]{0}', space=sflag, size = 0x4, scoped, tag = 'scoped memory for tpu_custom_call.1']
    %10 = vsyncpa [#allocation3], 0
    %11 = vsyncpa [#allocation6], 0
    %12 = vsyncpa [#allocation4], 0
    %13 = vsyncpa [#allocation10], 0
    // Predicated region
    $region2: #{tpu_custom_call.1} parent=1 // pred_check
      _
    $region3: #{tpu_custom_call.1} parent=1 // pred_check_branch
      %15 = sbr.rel (0) target = $region5
    $region4: #{tpu_custom_call.1} parent=1 // pred_region
      %s17 = ssub.s32 2048, 2048
      %18 = vsyncadd [#allocation3], %s17
      %s19 = sshll.u32 [#allocation2], 4
      %s20 = int_to_ptr.vmem [resolvable:$true] %s19
      %25 = dma.hbm_to_vmem [thread:$0]  %s0, 2048, %s20, [#allocation3], 128, 128, 8
    $region5: #{tpu_custom_call.1} parent=1 // pred_fallthru
      _
    // Predicated region
    $region6: #{tpu_custom_call.1} parent=1 // pred_check
      _
    $region7: #{tpu_custom_call.1} parent=1 // pred_check_branch
      %27 = sbr.rel (0) target = $region9
    $region8: #{tpu_custom_call.1} parent=1 // pred_region
      %s29 = ssub.s32 2048, 2048
      %30 = vsyncadd [#allocation6], %s29
      %s31 = sshll.u32 [#allocation5], 4
      %s32 = int_to_ptr.vmem [resolvable:$true] %s31
      %37 = dma.hbm_to_vmem [thread:$0]  %s1, 2048, %s32, [#allocation6], 128, 128, 8
    $region9: #{tpu_custom_call.1} parent=1 // pred_fallthru
      _
    // Predicated region
    $region10: #{tpu_custom_call.1} parent=1 // pred_check
      _
    $region11: #{tpu_custom_call.1} parent=1 // pred_check_branch
      %39 = sbr.rel (0) target = $region13
    $region12: #{tpu_custom_call.1} parent=1 // pred_region
      %s41 = ssub.s32 128, 128
      %42 = vsyncadd [#allocation6], %s41
      %s44 = sshll.u32 [#allocation7], 4
      %s45 = int_to_ptr.vmem [resolvable:$true] %s44
      %47 = dma.hbm_to_vmem [thread:$0]  %s2, 128, %s45, [#allocation6]
    $region13: #{tpu_custom_call.1} parent=1 // pred_fallthru
      _
    // Predicated region
    $region14: #{tpu_custom_call.1} parent=1 // pred_check
      _
    $region15: #{tpu_custom_call.1} parent=1 // pred_check_branch
      %49 = sbr.rel (0) target = $region17
    $region16: #{tpu_custom_call.1} parent=1 // pred_region
      %50 = dma.done [#allocation3], 2048
    $region17: #{tpu_custom_call.1} parent=1 // pred_fallthru
      _
    // Predicated region
    $region18: #{tpu_custom_call.1} parent=1 // pred_check
      _
    $region19: #{tpu_custom_call.1} parent=1 // pred_check_branch
      %52 = sbr.rel (0) target = $region21
    $region20: #{tpu_custom_call.1} parent=1 // pred_region
      %53 = dma.done [#allocation6], 2048
    $region21: #{tpu_custom_call.1} parent=1 // pred_fallthru
      _
    // Predicated region
    $region22: #{tpu_custom_call.1} parent=1 // pred_check
      _
    $region23: #{tpu_custom_call.1} parent=1 // pred_check_branch
      %55 = sbr.rel (0) target = $region25
    $region24: #{tpu_custom_call.1} parent=1 // pred_region
      %56 = dma.done [#allocation6], 128
    $region25: #{tpu_custom_call.1} parent=1 // pred_fallthru
      _
    %v57 = vld [vmem:[#allocation7] sm:$0xff]
    %v58 = vmul.f32 %v57, %v57
    %vm59 = vcmask 261120
    %v60 = vsel %vm59, %v58, 0.0
    %61 = vadd.xlane.f32.xlu0 %v60
    %v62 = vpop.xlane.xlu0 %61
    %v63 = vmax.f32 %v62, 1e-24
    %v64 = vrsqrt.pop %v63
    %v65 = vmul.f32 %v57, %v64
    %v66 = vld [vmem:[#allocation2] sm:$0xff]
    %v67 = vld [vmem:[#allocation2 + $0x8] sm:$0xff]
    %v68 = vld [vmem:[#allocation2 + $0x10] sm:$0xff]
    %v69 = vld [vmem:[#allocation2 + $0x18] sm:$0xff]
    %v70 = vld [vmem:[#allocation2 + $0x20] sm:$0xff]
    %v71 = vld [vmem:[#allocation2 + $0x28] sm:$0xff]
    %v72 = vld [vmem:[#allocation2 + $0x30] sm:$0xff]
    %v73 = vld [vmem:[#allocation2 + $0x38] sm:$0xff]
    %v74 = vld [vmem:[#allocation2 + $0x40] sm:$0xff]
    %v75 = vld [vmem:[#allocation2 + $0x48] sm:$0xff]
    %v76 = vld [vmem:[#allocation2 + $0x50] sm:$0xff]
    %v77 = vld [vmem:[#allocation2 + $0x58] sm:$0xff]
    %v78 = vld [vmem:[#allocation2 + $0x60] sm:$0xff]
    %v79 = vld [vmem:[#allocation2 + $0x68] sm:$0xff]
    %v80 = vld [vmem:[#allocation2 + $0x70] sm:$0xff]
    %v81 = vld [vmem:[#allocation2 + $0x78] sm:$0xff]
    %v82 = vmul.f32 %v66, %v66
    %v83 = vmul.f32 %v67, %v67
    %v84 = vmul.f32 %v68, %v68
    %v85 = vmul.f32 %v69, %v69
    %v86 = vmul.f32 %v70, %v70
    %v87 = vmul.f32 %v71, %v71
    %v88 = vmul.f32 %v72, %v72
    %v89 = vmul.f32 %v73, %v73
    %v90 = vmul.f32 %v74, %v74
    %v91 = vmul.f32 %v75, %v75
    %v92 = vmul.f32 %v76, %v76
    %v93 = vmul.f32 %v77, %v77
    %v94 = vmul.f32 %v78, %v78
    %v95 = vmul.f32 %v79, %v79
    %v96 = vmul.f32 %v80, %v80
    %v97 = vmul.f32 %v81, %v81
    %v98 = vsel %vm59, %v82, 0.0
    %99 = vadd.xlane.f32.xlu0 %v98
    %v100 = vpop.xlane.xlu0 %99
    %v101 = vsel %vm59, %v83, 0.0
    %102 = vadd.xlane.f32.xlu0 %v101
    %v103 = vpop.xlane.xlu0 %102
    %v104 = vsel %vm59, %v84, 0.0
    %105 = vadd.xlane.f32.xlu0 %v104
    %v106 = vpop.xlane.xlu0 %105
    %v107 = vsel %vm59, %v85, 0.0
    %108 = vadd.xlane.f32.xlu0 %v107
    %v109 = vpop.xlane.xlu0 %108
    %v110 = vsel %vm59, %v86, 0.0
    %111 = vadd.xlane.f32.xlu0 %v110
    %v112 = vpop.xlane.xlu0 %111
    %v113 = vsel %vm59, %v87, 0.0
    %114 = vadd.xlane.f32.xlu0 %v113
    %v115 = vpop.xlane.xlu0 %114
    %v116 = vsel %vm59, %v88, 0.0
    %117 = vadd.xlane.f32.xlu0 %v116
    %v118 = vpop.xlane.xlu0 %117
    %v119 = vsel %vm59, %v89, 0.0
    %120 = vadd.xlane.f32.xlu0 %v119
    %v121 = vpop.xlane.xlu0 %120
    %v122 = vsel %vm59, %v90, 0.0
    %123 = vadd.xlane.f32.xlu0 %v122
    %v124 = vpop.xlane.xlu0 %123
    %v125 = vsel %vm59, %v91, 0.0
    %126 = vadd.xlane.f32.xlu0 %v125
    %v127 = vpop.xlane.xlu0 %126
    %v128 = vsel %vm59, %v92, 0.0
    %129 = vadd.xlane.f32.xlu0 %v128
    %v130 = vpop.xlane.xlu0 %129
    %v131 = vsel %vm59, %v93, 0.0
    %132 = vadd.xlane.f32.xlu0 %v131
    %v133 = vpop.xlane.xlu0 %132
    %v134 = vsel %vm59, %v94, 0.0
    %135 = vadd.xlane.f32.xlu0 %v134
    %v136 = vpop.xlane.xlu0 %135
    %v137 = vsel %vm59, %v95, 0.0
    %138 = vadd.xlane.f32.xlu0 %v137
    %v139 = vpop.xlane.xlu0 %138
    %v140 = vsel %vm59, %v96, 0.0
    %141 = vadd.xlane.f32.xlu0 %v140
    %v142 = vpop.xlane.xlu0 %141
    %v143 = vsel %vm59, %v97, 0.0
    %144 = vadd.xlane.f32.xlu0 %v143
    %v145 = vpop.xlane.xlu0 %144
    %v146 = vmax.f32 %v100, 1e-24
    %v147 = vmax.f32 %v103, 1e-24
    %v148 = vmax.f32 %v106, 1e-24
    %v149 = vmax.f32 %v109, 1e-24
    %v150 = vmax.f32 %v112, 1e-24
    %v151 = vmax.f32 %v115, 1e-24
    %v152 = vmax.f32 %v118, 1e-24
    %v153 = vmax.f32 %v121, 1e-24
    %v154 = vmax.f32 %v124, 1e-24
    %v155 = vmax.f32 %v127, 1e-24
    %v156 = vmax.f32 %v130, 1e-24
    %v157 = vmax.f32 %v133, 1e-24
    %v158 = vmax.f32 %v136, 1e-24
    %v159 = vmax.f32 %v139, 1e-24
    %v160 = vmax.f32 %v142, 1e-24
    %v161 = vmax.f32 %v145, 1e-24
    %v162 = vrsqrt.pop %v146
    %v163 = vrsqrt.pop %v147
    %v164 = vrsqrt.pop %v148
    %v165 = vrsqrt.pop %v149
    %v166 = vrsqrt.pop %v150
    %v167 = vrsqrt.pop %v151
    %v168 = vrsqrt.pop %v152
    %v169 = vrsqrt.pop %v153
    %v170 = vrsqrt.pop %v154
    %v171 = vrsqrt.pop %v155
    %v172 = vrsqrt.pop %v156
    %v173 = vrsqrt.pop %v157
    %v174 = vrsqrt.pop %v158
    %v175 = vrsqrt.pop %v159
    %v176 = vrsqrt.pop %v160
    %v177 = vrsqrt.pop %v161
    %v178 = vmul.f32 %v66, %v162
    %v179 = vmul.f32 %v67, %v163
    %v180 = vmul.f32 %v68, %v164
    %v181 = vmul.f32 %v69, %v165
    %v182 = vmul.f32 %v70, %v166
    %v183 = vmul.f32 %v71, %v167
    %v184 = vmul.f32 %v72, %v168
    %v185 = vmul.f32 %v73, %v169
    %v186 = vmul.f32 %v74, %v170
    %v187 = vmul.f32 %v75, %v171
    %v188 = vmul.f32 %v76, %v172
    %v189 = vmul.f32 %v77, %v173
    %v190 = vmul.f32 %v78, %v174
    %v191 = vmul.f32 %v79, %v175
    %v192 = vmul.f32 %v80, %v176
    %v193 = vmul.f32 %v81, %v177
    %v194 = vld [vmem:[#allocation5] sm:$0xff]
    %v195 = vld [vmem:[#allocation5 + $0x8] sm:$0xff]
    %v196 = vld [vmem:[#allocation5 + $0x10] sm:$0xff]
    %v197 = vld [vmem:[#allocation5 + $0x18] sm:$0xff]
    %v198 = vld [vmem:[#allocation5 + $0x20] sm:$0xff]
    %v199 = vld [vmem:[#allocation5 + $0x28] sm:$0xff]
    %v200 = vld [vmem:[#allocation5 + $0x30] sm:$0xff]
    %v201 = vld [vmem:[#allocation5 + $0x38] sm:$0xff]
    %v202 = vld [vmem:[#allocation5 + $0x40] sm:$0xff]
    %v203 = vld [vmem:[#allocation5 + $0x48] sm:$0xff]
    %v204 = vld [vmem:[#allocation5 + $0x50] sm:$0xff]
    %v205 = vld [vmem:[#allocation5 + $0x58] sm:$0xff]
    %v206 = vld [vmem:[#allocation5 + $0x60] sm:$0xff]
    %v207 = vld [vmem:[#allocation5 + $0x68] sm:$0xff]
    %v208 = vld [vmem:[#allocation5 + $0x70] sm:$0xff]
    %v209 = vld [vmem:[#allocation5 + $0x78] sm:$0xff]
    %v210 = vmul.f32 %v194, %v194
    %v211 = vmul.f32 %v195, %v195
    %v212 = vmul.f32 %v196, %v196
    %v213 = vmul.f32 %v197, %v197
    %v214 = vmul.f32 %v198, %v198
    %v215 = vmul.f32 %v199, %v199
    %v216 = vmul.f32 %v200, %v200
    %v217 = vmul.f32 %v201, %v201
    %v218 = vmul.f32 %v202, %v202
    %v219 = vmul.f32 %v203, %v203
    %v220 = vmul.f32 %v204, %v204
    %v221 = vmul.f32 %v205, %v205
    %v222 = vmul.f32 %v206, %v206
    %v223 = vmul.f32 %v207, %v207
    %v224 = vmul.f32 %v208, %v208
    %v225 = vmul.f32 %v209, %v209
    %v226 = vsel %vm59, %v210, 0.0
    %227 = vadd.xlane.f32.xlu0 %v226
    %v228 = vpop.xlane.xlu0 %227
    %v229 = vsel %vm59, %v211, 0.0
    %230 = vadd.xlane.f32.xlu0 %v229
    %v231 = vpop.xlane.xlu0 %230
    %v232 = vsel %vm59, %v212, 0.0
    %233 = vadd.xlane.f32.xlu0 %v232
    %v234 = vpop.xlane.xlu0 %233
    %v235 = vsel %vm59, %v213, 0.0
    %236 = vadd.xlane.f32.xlu0 %v235
    %v237 = vpop.xlane.xlu0 %236
    %v238 = vsel %vm59, %v214, 0.0
    %239 = vadd.xlane.f32.xlu0 %v238
    %v240 = vpop.xlane.xlu0 %239
    %v241 = vsel %vm59, %v215, 0.0
    %242 = vadd.xlane.f32.xlu0 %v241
    %v243 = vpop.xlane.xlu0 %242
    %v244 = vsel %vm59, %v216, 0.0
    %245 = vadd.xlane.f32.xlu0 %v244
    %v246 = vpop.xlane.xlu0 %245
    %v247 = vsel %vm59, %v217, 0.0
    %248 = vadd.xlane.f32.xlu0 %v247
    %v249 = vpop.xlane.xlu0 %248
    %v250 = vsel %vm59, %v218, 0.0
    %251 = vadd.xlane.f32.xlu0 %v250
    %v252 = vpop.xlane.xlu0 %251
    %v253 = vsel %vm59, %v219, 0.0
    %254 = vadd.xlane.f32.xlu0 %v253
    %v255 = vpop.xlane.xlu0 %254
    %v256 = vsel %vm59, %v220, 0.0
    %257 = vadd.xlane.f32.xlu0 %v256
    %v258 = vpop.xlane.xlu0 %257
    %v259 = vsel %vm59, %v221, 0.0
    %260 = vadd.xlane.f32.xlu0 %v259
    %v261 = vpop.xlane.xlu0 %260
    %v262 = vsel %vm59, %v222, 0.0
    %263 = vadd.xlane.f32.xlu0 %v262
    %v264 = vpop.xlane.xlu0 %263
    %v265 = vsel %vm59, %v223, 0.0
    %266 = vadd.xlane.f32.xlu0 %v265
    %v267 = vpop.xlane.xlu0 %266
    %v268 = vsel %vm59, %v224, 0.0
    %269 = vadd.xlane.f32.xlu0 %v268
    %v270 = vpop.xlane.xlu0 %269
    %v271 = vsel %vm59, %v225, 0.0
    %272 = vadd.xlane.f32.xlu0 %v271
    %v273 = vpop.xlane.xlu0 %272
    %v274 = vmax.f32 %v228, 1e-24
    %v275 = vmax.f32 %v231, 1e-24
    %v276 = vmax.f32 %v234, 1e-24
    %v277 = vmax.f32 %v237, 1e-24
    %v278 = vmax.f32 %v240, 1e-24
    %v279 = vmax.f32 %v243, 1e-24
    %v280 = vmax.f32 %v246, 1e-24
    %v281 = vmax.f32 %v249, 1e-24
    %v282 = vmax.f32 %v252, 1e-24
    %v283 = vmax.f32 %v255, 1e-24
    %v284 = vmax.f32 %v258, 1e-24
    %v285 = vmax.f32 %v261, 1e-24
    %v286 = vmax.f32 %v264, 1e-24
    %v287 = vmax.f32 %v267, 1e-24
    %v288 = vmax.f32 %v270, 1e-24
    %v289 = vmax.f32 %v273, 1e-24
    %v290 = vrsqrt.pop %v274
    %v291 = vrsqrt.pop %v275
    %v292 = vrsqrt.pop %v276
    %v293 = vrsqrt.pop %v277
    %v294 = vrsqrt.pop %v278
    %v295 = vrsqrt.pop %v279
    %v296 = vrsqrt.pop %v280
    %v297 = vrsqrt.pop %v281
    %v298 = vrsqrt.pop %v282
    %v299 = vrsqrt.pop %v283
    %v300 = vrsqrt.pop %v284
    %v301 = vrsqrt.pop %v285
    %v302 = vrsqrt.pop %v286
    %v303 = vrsqrt.pop %v287
    %v304 = vrsqrt.pop %v288
    %v305 = vrsqrt.pop %v289
    %v306 = vmul.f32 %v194, %v290
    %v307 = vmul.f32 %v195, %v291
    %v308 = vmul.f32 %v196, %v292
    %v309 = vmul.f32 %v197, %v293
    %v310 = vmul.f32 %v198, %v294
    %v311 = vmul.f32 %v199, %v295
    %v312 = vmul.f32 %v200, %v296
    %v313 = vmul.f32 %v201, %v297
    %v314 = vmul.f32 %v202, %v298
    %v315 = vmul.f32 %v203, %v299
    %v316 = vmul.f32 %v204, %v300
    %v317 = vmul.f32 %v205, %v301
    %v318 = vmul.f32 %v206, %v302
    %v319 = vmul.f32 %v207, %v303
    %v320 = vmul.f32 %v208, %v304
    %v321 = vmul.f32 %v209, %v305
    %v323 = vsel %vm59, %v65, 0
    %v326 = vsel %vm59, %v178, 0
    %v329 = vsel %vm59, %v179, 0
    %v332 = vsel %vm59, %v180, 0
    %v335 = vsel %vm59, %v181, 0
    %v338 = vsel %vm59, %v182, 0
    %v341 = vsel %vm59, %v183, 0
    %v344 = vsel %vm59, %v184, 0
    %v347 = vsel %vm59, %v185, 0
    %v350 = vsel %vm59, %v186, 0
    %v353 = vsel %vm59, %v187, 0
    %v356 = vsel %vm59, %v188, 0
    %v359 = vsel %vm59, %v189, 0
    %v362 = vsel %vm59, %v190, 0
    %v365 = vsel %vm59, %v191, 0
    %v368 = vsel %vm59, %v192, 0
    %v371 = vsel %vm59, %v193, 0
    %373 = vmatprep.subr.mxu0 0.0
    %374 = vmatpush1.xpose.msra.mxu0 %v326
    %375 = vmatprep.subr.mxu0 0.0
    %376 = vmatpush1.xpose.msra.mxu0 %v329
    %377 = vmatprep.subr.mxu0 0.0
    %378 = vmatpush1.xpose.msra.mxu0 %v332
    %379 = vmatprep.subr.mxu0 0.0
    %380 = vmatpush1.xpose.msra.mxu0 %v335
    %381 = vmatprep.subr.mxu0 0.0
    %382 = vmatpush1.xpose.msra.mxu0 %v338
    %383 = vmatprep.subr.mxu0 0.0
    %384 = vmatpush1.xpose.msra.mxu0 %v341
    %385 = vmatprep.subr.mxu0 0.0
    %386 = vmatpush1.xpose.msra.mxu0 %v344
    %387 = vmatprep.subr.mxu0 0.0
    %388 = vmatpush1.xpose.msra.mxu0 %v347
    %389 = vmatprep.subr.mxu0 0.0
    %390 = vmatpush1.xpose.msra.mxu0 %v350
    %391 = vmatprep.subr.mxu0 0.0
    %392 = vmatpush1.xpose.msra.mxu0 %v353
    %393 = vmatprep.subr.mxu0 0.0
    %394 = vmatpush1.xpose.msra.mxu0 %v356
    %395 = vmatprep.subr.mxu0 0.0
    %396 = vmatpush1.xpose.msra.mxu0 %v359
    %397 = vmatprep.subr.mxu0 0.0
    %398 = vmatpush1.xpose.msra.mxu0 %v362
    %399 = vmatprep.subr.mxu0 0.0
    %400 = vmatpush1.xpose.msra.mxu0 %v365
    %401 = vmatprep.subr.mxu0 0.0
    %402 = vmatpush1.xpose.msra.mxu0 %v368
    %403 = vmatprep.subr.mxu0 0.0
    %404 = vmatpush1.xpose.msra.mxu0 %v371
    %405 = vmatprep.subr.mxu0 0.0
    %406 = vmatpush1.xpose.msra.mxu0 0.0
    %407 = vmatprep.subr.mxu0 0.0
    %408 = vmatpush1.xpose.msra.mxu0 0.0
    %409 = vmatprep.subr.mxu0 0.0
    %410 = vmatpush1.xpose.msra.mxu0 0.0
    %411 = vmatprep.subr.mxu0 0.0
    %412 = vmatpush1.xpose.msra.mxu0 0.0
    %413 = vmatprep.subr.mxu0 0.0
    %414 = vmatpush1.xpose.msra.mxu0 0.0
    %415 = vmatprep.subr.mxu0 0.0
    %416 = vmatpush1.xpose.msra.mxu0 0.0
    %417 = vmatprep.subr.mxu0 0.0
    %418 = vmatpush1.xpose.msra.mxu0 0.0
    %419 = vmatprep.subr.mxu0 0.0
    %420 = vmatpush1.xpose.msra.mxu0 0.0
    %421 = vmatprep.subr.mxu0 0.0
    %422 = vmatpush1.xpose.msra.mxu0 0.0
    %423 = vmatprep.subr.mxu0 0.0
    %424 = vmatpush1.xpose.msra.mxu0 0.0
    %425 = vmatprep.subr.mxu0 0.0
    %426 = vmatpush1.xpose.msra.mxu0 0.0
    %427 = vmatprep.subr.mxu0 0.0
    %428 = vmatpush1.xpose.msra.mxu0 0.0
    %429 = vmatprep.subr.mxu0 0.0
    %430 = vmatpush1.xpose.msra.mxu0 0.0
    %431 = vmatprep.subr.mxu0 0.0
    %432 = vmatpush1.xpose.msra.mxu0 0.0
    %433 = vmatprep.subr.mxu0 0.0
    %434 = vmatpush1.xpose.msra.mxu0 0.0
    %435 = vmatprep.subr.mxu0 0.0
    %436 = vmatpush1.xpose.msra.mxu0 0.0
    %437 = vmatprep.mubr.f32.mxu0 0.0
    %438 = vmatmul.mubr.f32.gmra.mrb[0].mxu0 %v323
    %v439 = vpop.f32.mrb[0].mxu0
    %v440 = vadd.f32 0.0, %v439
    %v441 = vpop.f32.mrb[0].mxu0
    %442 = vdwg.mxu0
    %443 = vst [vmem:[#allocation8] sm:$0xff] %v440
    %v445 = vsel %vm59, %v306, 0
    %v448 = vsel %vm59, %v307, 0
    %v451 = vsel %vm59, %v308, 0
    %v454 = vsel %vm59, %v309, 0
    %v457 = vsel %vm59, %v310, 0
    %v460 = vsel %vm59, %v311, 0
    %v463 = vsel %vm59, %v312, 0
    %v466 = vsel %vm59, %v313, 0
    %v469 = vsel %vm59, %v314, 0
    %v472 = vsel %vm59, %v315, 0
    %v475 = vsel %vm59, %v316, 0
    %v478 = vsel %vm59, %v317, 0
    %v481 = vsel %vm59, %v318, 0
    %v484 = vsel %vm59, %v319, 0
    %v487 = vsel %vm59, %v320, 0
    %v490 = vsel %vm59, %v321, 0
    %492 = vmatprep.subr.mxu0 0.0
    %493 = vmatpush1.xpose.msra.mxu0 %v445
    %494 = vmatprep.subr.mxu0 0.0
    %495 = vmatpush1.xpose.msra.mxu0 %v448
    %496 = vmatprep.subr.mxu0 0.0
    %497 = vmatpush1.xpose.msra.mxu0 %v451
    %498 = vmatprep.subr.mxu0 0.0
    %499 = vmatpush1.xpose.msra.mxu0 %v454
    %500 = vmatprep.subr.mxu0 0.0
    %501 = vmatpush1.xpose.msra.mxu0 %v457
    %502 = vmatprep.subr.mxu0 0.0
    %503 = vmatpush1.xpose.msra.mxu0 %v460
    %504 = vmatprep.subr.mxu0 0.0
    %505 = vmatpush1.xpose.msra.mxu0 %v463
    %506 = vmatprep.subr.mxu0 0.0
    %507 = vmatpush1.xpose.msra.mxu0 %v466
    %508 = vmatprep.subr.mxu0 0.0
    %509 = vmatpush1.xpose.msra.mxu0 %v469
    %510 = vmatprep.subr.mxu0 0.0
    %511 = vmatpush1.xpose.msra.mxu0 %v472
    %512 = vmatprep.subr.mxu0 0.0
    %513 = vmatpush1.xpose.msra.mxu0 %v475
    %514 = vmatprep.subr.mxu0 0.0
    %515 = vmatpush1.xpose.msra.mxu0 %v478
    %516 = vmatprep.subr.mxu0 0.0
    %517 = vmatpush1.xpose.msra.mxu0 %v481
    %518 = vmatprep.subr.mxu0 0.0
    %519 = vmatpush1.xpose.msra.mxu0 %v484
    %520 = vmatprep.subr.mxu0 0.0
    %521 = vmatpush1.xpose.msra.mxu0 %v487
    %522 = vmatprep.subr.mxu0 0.0
    %523 = vmatpush1.xpose.msra.mxu0 %v490
    %524 = vmatprep.subr.mxu0 0.0
    %525 = vmatpush1.xpose.msra.mxu0 0.0
    %526 = vmatprep.subr.mxu0 0.0
    %527 = vmatpush1.xpose.msra.mxu0 0.0
    %528 = vmatprep.subr.mxu0 0.0
    %529 = vmatpush1.xpose.msra.mxu0 0.0
    %530 = vmatprep.subr.mxu0 0.0
    %531 = vmatpush1.xpose.msra.mxu0 0.0
    %532 = vmatprep.subr.mxu0 0.0
    %533 = vmatpush1.xpose.msra.mxu0 0.0
    %534 = vmatprep.subr.mxu0 0.0
    %535 = vmatpush1.xpose.msra.mxu0 0.0
    %536 = vmatprep.subr.mxu0 0.0
    %537 = vmatpush1.xpose.msra.mxu0 0.0
    %538 = vmatprep.subr.mxu0 0.0
    %539 = vmatpush1.xpose.msra.mxu0 0.0
    %540 = vmatprep.subr.mxu0 0.0
    %541 = vmatpush1.xpose.msra.mxu0 0.0
    %542 = vmatprep.subr.mxu0 0.0
    %543 = vmatpush1.xpose.msra.mxu0 0.0
    %544 = vmatprep.subr.mxu0 0.0
    %545 = vmatpush1.xpose.msra.mxu0 0.0
    %546 = vmatprep.subr.mxu0 0.0
    %547 = vmatpush1.xpose.msra.mxu0 0.0
    %548 = vmatprep.subr.mxu0 0.0
    %549 = vmatpush1.xpose.msra.mxu0 0.0
    %550 = vmatprep.subr.mxu0 0.0
    %551 = vmatpush1.xpose.msra.mxu0 0.0
    %552 = vmatprep.subr.mxu0 0.0
    %553 = vmatpush1.xpose.msra.mxu0 0.0
    %554 = vmatprep.subr.mxu0 0.0
    %555 = vmatpush1.xpose.msra.mxu0 0.0
    %556 = vmatprep.mubr.f32.mxu0 0.0
    %557 = vmatmul.mubr.f32.gmra.mrb[0].mxu0 %v323
    %v558 = vpop.f32.mrb[0].mxu0
    %v559 = vadd.f32 0.0, %v558
    %v560 = vpop.f32.mrb[0].mxu0
    %561 = vdwg.mxu0
    %562 = vst [vmem:[#allocation9] sm:$0xff] %v559
    // Predicated region
    $region26: #{tpu_custom_call.1} parent=1 // pred_check
      _
    $region27: #{tpu_custom_call.1} parent=1 // pred_check_branch
      %564 = sbr.rel (0) target = $region29
    $region28: #{tpu_custom_call.1} parent=1 // pred_region
      %s566 = ssub.s32 128, 128
      %567 = vsyncadd [#allocation4], %s566
      %s569 = sshll.u32 [#allocation8], 4
      %s570 = int_to_ptr.vmem [resolvable:$true] %s569
      %572 = dma.vmem_to_hbm [thread:$0]  %s570, 128, %s3, [#allocation4]
    $region29: #{tpu_custom_call.1} parent=1 // pred_fallthru
      _
    // Predicated region
    $region30: #{tpu_custom_call.1} parent=1 // pred_check
      _
    $region31: #{tpu_custom_call.1} parent=1 // pred_check_branch
      %574 = sbr.rel (0) target = $region33
    $region32: #{tpu_custom_call.1} parent=1 // pred_region
      %s576 = ssub.s32 128, 128
      %577 = vsyncadd [#allocation10], %s576
      %s579 = sshll.u32 [#allocation9], 4
      %s580 = int_to_ptr.vmem [resolvable:$true] %s579
      %582 = dma.vmem_to_hbm [thread:$0]  %s580, 128, %s4, [#allocation10]
    $region33: #{tpu_custom_call.1} parent=1 // pred_fallthru
      _
    // Predicated region
    $region34: #{tpu_custom_call.1} parent=1 // pred_check
      _
    $region35: #{tpu_custom_call.1} parent=1 // pred_check_branch
      %584 = sbr.rel (0) target = $region37
    $region36: #{tpu_custom_call.1} parent=1 // pred_region
      %585 = dma.done [#allocation4], 128
    $region37: #{tpu_custom_call.1} parent=1 // pred_fallthru
      _
    // Predicated region
    $region38: #{tpu_custom_call.1} parent=1 // pred_check
      _
    $region39: #{tpu_custom_call.1} parent=1 // pred_check_branch
      %587 = sbr.rel (0) target = $region41
    $region40: #{tpu_custom_call.1} parent=1 // pred_region
      %588 = dma.done [#allocation10], 128
    $region41: #{tpu_custom_call.1} parent=1 // pred_fallthru
      _
    %589 = vsyncpa [#allocation3], 1
    %590 = vsyncpa [#allocation6], 1
    %591 = vsyncpa [#allocation4], 1
    %592 = vsyncpa [#allocation10], 1

</llo_original>
